<compile_context>
chip_gen: v7x
topology: tpu7x:2x2x1
jax: 0.10.0
libtpu: 0.0.40
codegen_flags: <defaults>
</compile_context>

<pallas_src>
import functools

import jax
import jax.numpy as jnp
from jax import lax
from jax.experimental import pallas as pl
from jax.experimental.pallas import tpu as pltpu

EPS = 1e-5  # nn.BatchNorm2d default eps
VMEM_LIMIT = 32 * 1024 * 1024  # safe on v5e/v6e (128 MiB) and v7x (64 MiB)


def _pick_row_tile(ho):
    """Output rows per grid step: whole image when small, else a mult-of-8 divisor."""
    if ho <= 64:
        return ho
    for rt in (64, 56, 48, 40, 32, 24, 16, 8):
        if ho % rt == 0:
            return rt
    return ho  # fall back to whole-image rows


def _conv_tile(x_ref, t_ref, k, row_t):
    """Conv for one row tile -> (row_t, Wo*C2) f32.

    x_ref: (1, row_t+k-1[, =H], W*C1) bf16 input rows (flattened W*C1 lane dim).
    t_ref: (k, W*C1, Wo*C2) bf16 banded weight, resident in VMEM.
    """
    n_cols = t_ref.shape[-1]
    acc = jnp.zeros((row_t, n_cols), jnp.float32)
    for dy in range(k):  # static unroll; k deep matmuls, f32 accumulation
        lhs = x_ref[0, dy:dy + row_t, :]                     # (row_t, W*C1) bf16
        acc = acc + jnp.dot(lhs, t_ref[dy],                  # (W*C1, Wo*C2) bf16
                            preferred_element_type=jnp.float32)
    return acc


def _stats_kernel(x_ref, t_ref, stat_ref, *, k, row_t):
    """Pass 1: conv + per-(x-position, channel) sum / sum-of-squares, per image."""
    @pl.when(pl.program_id(1) == 0)
    def _init():
        stat_ref[...] = jnp.zeros_like(stat_ref)

    acc = _conv_tile(x_ref, t_ref, k, row_t)                 # (row_t, Wo*C2) f32
    stat_ref[0:1, :] += jnp.sum(acc, axis=0, keepdims=True)  # sum
    stat_ref[1:2, :] += jnp.sum(acc * acc, axis=0, keepdims=True)  # sum of squares


def _norm_kernel(x_ref, t_ref, sc_ref, sh_ref, o_ref, *, k, row_t):
    """Pass 2: recompute conv, apply folded BN scale/shift + ReLU, exact-size store."""
    acc = _conv_tile(x_ref, t_ref, k, row_t)                 # (row_t, Wo*C2) f32
    o_ref[...] = jnp.maximum(acc * sc_ref[...] + sh_ref[...], 0.0)


@functools.partial(jax.jit, static_argnames=("k",))
def conv_module_forward(x_nchw, weight_oihw, gamma, beta, k):
    """ConvModule forward.  x_nchw: (N, C1, H, W) f32 -> (N, C2, Ho, Wo) f32."""
    N, C1, H, W = x_nchw.shape
    C2 = weight_oihw.shape[0]
    Ho, Wo = H - k + 1, W - k + 1          # Conv2d defaults: stride 1, no padding
    WC1 = W * C1                           # lane dim of the input rows
    NC = Wo * C2                           # lane dim of conv output / stats

    row_t = _pick_row_tile(Ho)             # output rows per grid step
    rb = Ho // row_t                       # row tiles per image
    row_in = row_t + k - 1                 # overlapping input rows per step

    # NHWC rows with W and C1 flattened into the lane dim, bf16 for the MXU.
    x_rows = jnp.transpose(x_nchw, (0, 2, 3, 1)).reshape(N, H, WC1).astype(jnp.bfloat16)

    # Banded (Toeplitz) weight:  T[dy, xi*C1+c1, xo*C2+c2] = w[c2, c1, dy, xi-xo]
    # when 0 <= xi-xo < k, else 0.  Then, per dy,
    #   conv_rows = x_rows[y+dy] @ T[dy]   with contraction depth W*C1.
    w_t = jnp.transpose(weight_oihw, (2, 3, 1, 0)).astype(jnp.float32)   # (k,k,C1,C2)
    eye = jnp.eye(Wo, dtype=jnp.float32)
    t_parts = []
    for dy in range(k):
        t_dy = jnp.zeros((WC1, NC), jnp.float32)
        for dx in range(k):
            blk = jnp.einsum("oO,ic->oiOc", eye, w_t[dy, dx]).reshape(Wo * C1, NC)
            t_dy = t_dy + jnp.pad(blk, ((dx * C1, (W - Wo - dx) * C1), (0, 0)))
        t_parts.append(t_dy)
    T = jnp.stack(t_parts, axis=0).astype(jnp.bfloat16)                  # (k, WC1, NC)

    # --- Block specs (shared by both passes) ---
    if rb == 1:
        # Whole image per step: full-H block, plain blocked indexing (demo path).
        x_spec = pl.BlockSpec((1, H, WC1), lambda n, r: (n, 0, 0))
    else:
        # Overlapping row windows via element indexing on the H axis.
        x_spec = pl.BlockSpec((1, pl.Element(row_in), WC1),
                              lambda n, r: (n, r * row_t, 0))
    t_spec = pl.BlockSpec((k, WC1, NC), lambda n, r: (0, 0, 0))     # resident weight
    vec_spec = pl.BlockSpec((1, NC), lambda n, r: (0, 0))           # resident scale/shift
    grid = (N, rb)

    # ---- Pass 1: conv + per-image sum / sum-of-squares partials ----
    stats = pl.pallas_call(
        functools.partial(_stats_kernel, k=k, row_t=row_t),
        out_shape=jax.ShapeDtypeStruct((N, 2, NC), jnp.float32),
        grid=grid,
        in_specs=[x_spec, t_spec],
        out_specs=pl.BlockSpec((None, 2, NC), lambda n, r: (n, 0, 0)),
        compiler_params=pltpu.CompilerParams(
            dimension_semantics=("parallel", "arbitrary"),   # batch axis -> megacore
            vmem_limit_bytes=VMEM_LIMIT),
    )(x_rows, T)

    # Fold training-mode BN (batch mean, biased variance) into scale/shift (f32, tiny).
    m_count = N * Ho * Wo
    st = stats.reshape(N, 2, Wo, C2)
    s = jnp.sum(st[:, 0], axis=(0, 1))                      # (C2,) per-channel sum
    sq = jnp.sum(st[:, 1], axis=(0, 1))                     # (C2,) per-channel sum sq
    mean = s / m_count
    var = jnp.maximum(sq / m_count - mean * mean, 0.0)
    scale = gamma.astype(jnp.float32) * lax.rsqrt(var + EPS)
    shift = beta.astype(jnp.float32) - mean * scale
    scale_t = jnp.tile(scale, Wo).reshape(1, NC)            # lane-order: xo*C2 + c2
    shift_t = jnp.tile(shift, Wo).reshape(1, NC)

    # ---- Pass 2: conv + scale/shift + ReLU, exact-size (no channel padding) output ----
    out = pl.pallas_call(
        functools.partial(_norm_kernel, k=k, row_t=row_t),
        out_shape=jax.ShapeDtypeStruct((N, Ho, NC), jnp.float32),
        grid=grid,
        in_specs=[x_spec, t_spec, vec_spec, vec_spec],
        out_specs=pl.BlockSpec((None, row_t, NC), lambda n, r: (n, r, 0)),
        compiler_params=pltpu.CompilerParams(
            dimension_semantics=("parallel", "parallel"),
            vmem_limit_bytes=VMEM_LIMIT),
    )(x_rows, T, scale_t, shift_t)

    # Exact-size layout fix-up to PyTorch NCHW (16x less HBM than the old padded path).
    return jnp.transpose(out.reshape(N, Ho, Wo, C2), (0, 3, 1, 2))


if __name__ == "__main__":
    key = jax.random.PRNGKey(0)
    k1, k2, k3, k4 = jax.random.split(key, 4)

    # Small shapes consistent with ConvModule(c1=4, c2=8, k=3) on a 16x16 input.
    N, C1, C2, H, W, K = 2, 4, 8, 16, 16, 3

    x = jax.random.normal(k1, (N, C1, H, W), jnp.float32)
    fan_in = C1 * K * K
    weight = jax.random.normal(k2, (C2, C1, K, K), jnp.float32) / jnp.sqrt(float(fan_in))
    gamma = 1.0 + 0.1 * jax.random.normal(k3, (C2,), jnp.float32)   # BN weight
    beta = 0.1 * jax.random.normal(k4, (C2,), jnp.float32)          # BN bias

    out = conv_module_forward(x, weight, gamma, beta, K)
    out = jax.block_until_ready(out)

    # Pure-JAX reference with matching bf16 inputs / f32 accumulation.
    conv = lax.conv_general_dilated(
        x.astype(jnp.bfloat16), weight.astype(jnp.bfloat16),
        window_strides=(1, 1), padding="VALID",
        dimension_numbers=("NCHW", "OIHW", "NCHW"),
        preferred_element_type=jnp.float32)
    mean = jnp.mean(conv, axis=(0, 2, 3), keepdims=True)
    var = jnp.var(conv, axis=(0, 2, 3), keepdims=True)
    ref = jnp.maximum(
        (conv - mean) * lax.rsqrt(var + EPS) * gamma.reshape(1, C2, 1, 1)
        + beta.reshape(1, C2, 1, 1),
        0.0)

    assert out.shape == (N, C2, H - K + 1, W - K + 1)
    err = float(jnp.max(jnp.abs(out - ref)))
    assert jnp.allclose(out, ref, atol=5e-3, rtol=5e-3), err
    print("KERNEL_OK")
</pallas_src>

<mosaic_0001>
module attributes {stable_mosaic.version = 11 : i64} {
  func.func @_stats_kernel(%arg0: i32, %arg1: i32, %arg2: memref<1x16x64xbf16, #tpu.memory_space<vmem>>, %arg3: memref<3x64x112xbf16, #tpu.memory_space<vmem>>, %arg4: memref<1x2x112xf32, #tpu.memory_space<vmem>>) attributes {dimension_semantics = [#tpu.dimension_semantics<parallel>, #tpu.dimension_semantics<arbitrary>], iteration_bounds = array<i64: 2, 1>, scalar_prefetch = 0 : i64, scratch_operands = 0 : i64, tpu.core_type = #tpu.core_type<tc>, window_params = [{transform_indices = @transform_0, window_bounds = array<i64: 1, 16, 64>}, {pipeline_mode = #tpu.pipeline_mode<synchronous>, transform_indices = @transform_1, window_bounds = array<i64: 3, 64, 112>}, {transform_indices = @transform_2, window_bounds = array<i64: 1, 2, 112>}]} {
    %c0_i32 = arith.constant 0 : i32
    %0 = arith.cmpi eq, %arg1, %c0_i32 : i32
    %1 = arith.extui %0 : i1 to i32
    %c0_i32_0 = arith.constant 0 : i32
    %2 = arith.cmpi ne, %1, %c0_i32_0 : i32
    scf.if %2 {
      %cst_33 = arith.constant 0.000000e+00 : f32
      %39 = vector.broadcast %cst_33 : f32 to vector<2x112xf32>
      %c0_34 = arith.constant 0 : index
      %c0_35 = arith.constant 0 : index
      %c0_36 = arith.constant 0 : index
      %40 = vector.load %arg4[%c0_34, %c0_35, %c0_36] : memref<1x2x112xf32, #tpu.memory_space<vmem>>, vector<1x2x112xf32>
      %41 = vector.shape_cast %40 : vector<1x2x112xf32> to vector<2x112xf32>
      %42 = vector.shape_cast %39 : vector<2x112xf32> to vector<1x2x112xf32>
      tpu.vector_store %arg4[%c0_34, %c0_35, %c0_36], %42 {strides = array<i32>} : memref<1x2x112xf32, #tpu.memory_space<vmem>>, vector<1x2x112xf32>,
    } else {
    }
    %cst = arith.constant 0.000000e+00 : f32
    %3 = vector.broadcast %cst : f32 to vector<14x112xf32>
    %c0 = arith.constant 0 : index
    %c0_1 = arith.constant 0 : index
    %c0_2 = arith.constant 0 : index
    %4 = vector.load %arg2[%c0, %c0_1, %c0_2] : memref<1x16x64xbf16, #tpu.memory_space<vmem>>, vector<1x14x64xbf16>
    %5 = vector.shape_cast %4 : vector<1x14x64xbf16> to vector<14x64xbf16>
    %c0_3 = arith.constant 0 : index
    %c0_4 = arith.constant 0 : index
    %c0_5 = arith.constant 0 : index
    %6 = vector.load %arg3[%c0_3, %c0_4, %c0_5] : memref<3x64x112xbf16, #tpu.memory_space<vmem>>, vector<1x64x112xbf16>
    %7 = vector.shape_cast %6 : vector<1x64x112xbf16> to vector<64x112xbf16>
    %cst_6 = arith.constant dense<0.000000e+00> : vector<14x112xf32>
    %8 = tpu.matmul %5, %7, %cst_6 {dimension_numbers = #tpu.dot_dimension_numbers<[1], [0], [0], [1], [0, 0, 1, 1], [], []>} : vector<14x64xbf16>, vector<64x112xbf16>, vector<14x112xf32> -> vector<14x112xf32>
    %9 = arith.addf %3, %8 : vector<14x112xf32>
    %c0_7 = arith.constant 0 : index
    %c1 = arith.constant 1 : index
    %c0_8 = arith.constant 0 : index
    %10 = vector.load %arg2[%c0_7, %c1, %c0_8] : memref<1x16x64xbf16, #tpu.memory_space<vmem>>, vector<1x14x64xbf16>
    %11 = vector.shape_cast %10 : vector<1x14x64xbf16> to vector<14x64xbf16>
    %c1_9 = arith.constant 1 : index
    %c0_10 = arith.constant 0 : index
    %c0_11 = arith.constant 0 : index
    %12 = vector.load %arg3[%c1_9, %c0_10, %c0_11] : memref<3x64x112xbf16, #tpu.memory_space<vmem>>, vector<1x64x112xbf16>
    %13 = vector.shape_cast %12 : vector<1x64x112xbf16> to vector<64x112xbf16>
    %cst_12 = arith.constant dense<0.000000e+00> : vector<14x112xf32>
    %14 = tpu.matmul %11, %13, %cst_12 {dimension_numbers = #tpu.dot_dimension_numbers<[1], [0], [0], [1], [0, 0, 1, 1], [], []>} : vector<14x64xbf16>, vector<64x112xbf16>, vector<14x112xf32> -> vector<14x112xf32>
    %15 = arith.addf %9, %14 : vector<14x112xf32>
    %c0_13 = arith.constant 0 : index
    %c2 = arith.constant 2 : index
    %c0_14 = arith.constant 0 : index
    %16 = vector.load %arg2[%c0_13, %c2, %c0_14] : memref<1x16x64xbf16, #tpu.memory_space<vmem>>, vector<1x14x64xbf16>
    %17 = vector.shape_cast %16 : vector<1x14x64xbf16> to vector<14x64xbf16>
    %c2_15 = arith.constant 2 : index
    %c0_16 = arith.constant 0 : index
    %c0_17 = arith.constant 0 : index
    %18 = vector.load %arg3[%c2_15, %c0_16, %c0_17] : memref<3x64x112xbf16, #tpu.memory_space<vmem>>, vector<1x64x112xbf16>
    %19 = vector.shape_cast %18 : vector<1x64x112xbf16> to vector<64x112xbf16>
    %cst_18 = arith.constant dense<0.000000e+00> : vector<14x112xf32>
    %20 = tpu.matmul %17, %19, %cst_18 {dimension_numbers = #tpu.dot_dimension_numbers<[1], [0], [0], [1], [0, 0, 1, 1], [], []>} : vector<14x64xbf16>, vector<64x112xbf16>, vector<14x112xf32> -> vector<14x112xf32>
    %21 = arith.addf %15, %20 : vector<14x112xf32>
    %c0_19 = arith.constant 0 : index
    %c0_20 = arith.constant 0 : index
    %c0_21 = arith.constant 0 : index
    %22 = vector.load %arg4[%c0_19, %c0_20, %c0_21] : memref<1x2x112xf32, #tpu.memory_space<vmem>>, vector<1x1x112xf32>
    %23 = vector.shape_cast %22 : vector<1x1x112xf32> to vector<1x112xf32>
    %cst_22 = arith.constant dense<0.000000e+00> : vector<112xf32>
    %24 = vector.multi_reduction <add>, %21, %cst_22 [0] : vector<14x112xf32> to vector<112xf32>
    %25 = vector.shape_cast %24 : vector<112xf32> to vector<1x112xf32>
    %26 = arith.addf %23, %25 : vector<1x112xf32>
    %c0_23 = arith.constant 0 : index
    %c0_24 = arith.constant 0 : index
    %c0_25 = arith.constant 0 : index
    %27 = vector.load %arg4[%c0_23, %c0_24, %c0_25] : memref<1x2x112xf32, #tpu.memory_space<vmem>>, vector<1x1x112xf32>
    %28 = vector.shape_cast %27 : vector<1x1x112xf32> to vector<1x112xf32>
    %29 = vector.shape_cast %26 : vector<1x112xf32> to vector<1x1x112xf32>
    tpu.vector_store %arg4[%c0_23, %c0_24, %c0_25], %29 {strides = array<i32>} : memref<1x2x112xf32, #tpu.memory_space<vmem>>, vector<1x1x112xf32>,
    %c0_26 = arith.constant 0 : index
    %c1_27 = arith.constant 1 : index
    %c0_28 = arith.constant 0 : index
    %30 = vector.load %arg4[%c0_26, %c1_27, %c0_28] : memref<1x2x112xf32, #tpu.memory_space<vmem>>, vector<1x1x112xf32>
    %31 = vector.shape_cast %30 : vector<1x1x112xf32> to vector<1x112xf32>
    %32 = arith.mulf %21, %21 : vector<14x112xf32>
    %cst_29 = arith.constant dense<0.000000e+00> : vector<112xf32>
    %33 = vector.multi_reduction <add>, %32, %cst_29 [0] : vector<14x112xf32> to vector<112xf32>
    %34 = vector.shape_cast %33 : vector<112xf32> to vector<1x112xf32>
    %35 = arith.addf %31, %34 : vector<1x112xf32>
    %c0_30 = arith.constant 0 : index
    %c1_31 = arith.constant 1 : index
    %c0_32 = arith.constant 0 : index
    %36 = vector.load %arg4[%c0_30, %c1_31, %c0_32] : memref<1x2x112xf32, #tpu.memory_space<vmem>>, vector<1x1x112xf32>
    %37 = vector.shape_cast %36 : vector<1x1x112xf32> to vector<1x112xf32>
    %38 = vector.shape_cast %35 : vector<1x112xf32> to vector<1x1x112xf32>
    tpu.vector_store %arg4[%c0_30, %c1_31, %c0_32], %38 {strides = array<i32>} : memref<1x2x112xf32, #tpu.memory_space<vmem>>, vector<1x1x112xf32>,
    return
  }
  func.func @transform_0(%arg0: i32, %arg1: i32) -> (i32, i32, i32) {
    %c0_i32 = arith.constant 0 : i32
    %c0_i32_0 = arith.constant 0 : i32
    %c0_i32_1 = arith.constant 0 : i32
    return %arg0, %c0_i32, %c0_i32_0 : i32, i32, i32
  }
  func.func @transform_1(%arg0: i32, %arg1: i32) -> (i32, i32, i32) {
    %c0_i32 = arith.constant 0 : i32
    %c0_i32_0 = arith.constant 0 : i32
    %c0_i32_1 = arith.constant 0 : i32
    %c0_i32_2 = arith.constant 0 : i32
    return %c0_i32, %c0_i32_0, %c0_i32_1 : i32, i32, i32
  }
  func.func @transform_2(%arg0: i32, %arg1: i32) -> (i32, i32, i32) {
    %c0_i32 = arith.constant 0 : i32
    %c0_i32_0 = arith.constant 0 : i32
    %c0_i32_1 = arith.constant 0 : i32
    return %arg0, %c0_i32, %c0_i32_0 : i32, i32, i32
  }
}

module attributes {stable_mosaic.version = 11 : i64} {
  func.func @_norm_kernel(%arg0: i32, %arg1: i32, %arg2: memref<1x16x64xbf16, #tpu.memory_space<vmem>>, %arg3: memref<3x64x112xbf16, #tpu.memory_space<vmem>>, %arg4: memref<1x112xf32, #tpu.memory_space<vmem>>, %arg5: memref<1x112xf32, #tpu.memory_space<vmem>>, %arg6: memref<1x14x112xf32, #tpu.memory_space<vmem>>) attributes {dimension_semantics = [#tpu.dimension_semantics<parallel>, #tpu.dimension_semantics<parallel>], iteration_bounds = array<i64: 2, 1>, scalar_prefetch = 0 : i64, scratch_operands = 0 : i64, tpu.core_type = #tpu.core_type<tc>, window_params = [{transform_indices = @transform_0, window_bounds = array<i64: 1, 16, 64>}, {pipeline_mode = #tpu.pipeline_mode<synchronous>, transform_indices = @transform_1, window_bounds = array<i64: 3, 64, 112>}, {pipeline_mode = #tpu.pipeline_mode<synchronous>, transform_indices = @transform_2, window_bounds = array<i64: 1, 112>}, {pipeline_mode = #tpu.pipeline_mode<synchronous>, transform_indices = @transform_3, window_bounds = array<i64: 1, 112>}, {transform_indices = @transform_4, window_bounds = array<i64: 1, 14, 112>}]} {
    %cst = arith.constant 0.000000e+00 : f32
    %0 = vector.broadcast %cst : f32 to vector<14x112xf32>
    %c0 = arith.constant 0 : index
    %c0_0 = arith.constant 0 : index
    %c0_1 = arith.constant 0 : index
    %1 = vector.load %arg2[%c0, %c0_0, %c0_1] : memref<1x16x64xbf16, #tpu.memory_space<vmem>>, vector<1x14x64xbf16>
    %2 = vector.shape_cast %1 : vector<1x14x64xbf16> to vector<14x64xbf16>
    %c0_2 = arith.constant 0 : index
    %c0_3 = arith.constant 0 : index
    %c0_4 = arith.constant 0 : index
    %3 = vector.load %arg3[%c0_2, %c0_3, %c0_4] : memref<3x64x112xbf16, #tpu.memory_space<vmem>>, vector<1x64x112xbf16>
    %4 = vector.shape_cast %3 : vector<1x64x112xbf16> to vector<64x112xbf16>
    %cst_5 = arith.constant dense<0.000000e+00> : vector<14x112xf32>
    %5 = tpu.matmul %2, %4, %cst_5 {dimension_numbers = #tpu.dot_dimension_numbers<[1], [0], [0], [1], [0, 0, 1, 1], [], []>} : vector<14x64xbf16>, vector<64x112xbf16>, vector<14x112xf32> -> vector<14x112xf32>
    %6 = arith.addf %0, %5 : vector<14x112xf32>
    %c0_6 = arith.constant 0 : index
    %c1 = arith.constant 1 : index
    %c0_7 = arith.constant 0 : index
    %7 = vector.load %arg2[%c0_6, %c1, %c0_7] : memref<1x16x64xbf16, #tpu.memory_space<vmem>>, vector<1x14x64xbf16>
    %8 = vector.shape_cast %7 : vector<1x14x64xbf16> to vector<14x64xbf16>
    %c1_8 = arith.constant 1 : index
    %c0_9 = arith.constant 0 : index
    %c0_10 = arith.constant 0 : index
    %9 = vector.load %arg3[%c1_8, %c0_9, %c0_10] : memref<3x64x112xbf16, #tpu.memory_space<vmem>>, vector<1x64x112xbf16>
    %10 = vector.shape_cast %9 : vector<1x64x112xbf16> to vector<64x112xbf16>
    %cst_11 = arith.constant dense<0.000000e+00> : vector<14x112xf32>
    %11 = tpu.matmul %8, %10, %cst_11 {dimension_numbers = #tpu.dot_dimension_numbers<[1], [0], [0], [1], [0, 0, 1, 1], [], []>} : vector<14x64xbf16>, vector<64x112xbf16>, vector<14x112xf32> -> vector<14x112xf32>
    %12 = arith.addf %6, %11 : vector<14x112xf32>
    %c0_12 = arith.constant 0 : index
    %c2 = arith.constant 2 : index
    %c0_13 = arith.constant 0 : index
    %13 = vector.load %arg2[%c0_12, %c2, %c0_13] : memref<1x16x64xbf16, #tpu.memory_space<vmem>>, vector<1x14x64xbf16>
    %14 = vector.shape_cast %13 : vector<1x14x64xbf16> to vector<14x64xbf16>
    %c2_14 = arith.constant 2 : index
    %c0_15 = arith.constant 0 : index
    %c0_16 = arith.constant 0 : index
    %15 = vector.load %arg3[%c2_14, %c0_15, %c0_16] : memref<3x64x112xbf16, #tpu.memory_space<vmem>>, vector<1x64x112xbf16>
    %16 = vector.shape_cast %15 : vector<1x64x112xbf16> to vector<64x112xbf16>
    %cst_17 = arith.constant dense<0.000000e+00> : vector<14x112xf32>
    %17 = tpu.matmul %14, %16, %cst_17 {dimension_numbers = #tpu.dot_dimension_numbers<[1], [0], [0], [1], [0, 0, 1, 1], [], []>} : vector<14x64xbf16>, vector<64x112xbf16>, vector<14x112xf32> -> vector<14x112xf32>
    %18 = arith.addf %12, %17 : vector<14x112xf32>
    %c0_18 = arith.constant 0 : index
    %c0_19 = arith.constant 0 : index
    %19 = vector.load %arg4[%c0_18, %c0_19] : memref<1x112xf32, #tpu.memory_space<vmem>>, vector<1x112xf32>
    %20 = vector.broadcast %19 : vector<1x112xf32> to vector<14x112xf32>
    %21 = arith.mulf %18, %20 : vector<14x112xf32>
    %c0_20 = arith.constant 0 : index
    %c0_21 = arith.constant 0 : index
    %22 = vector.load %arg5[%c0_20, %c0_21] : memref<1x112xf32, #tpu.memory_space<vmem>>, vector<1x112xf32>
    %23 = vector.broadcast %22 : vector<1x112xf32> to vector<14x112xf32>
    %24 = arith.addf %21, %23 : vector<14x112xf32>
    %cst_22 = arith.constant 0.000000e+00 : f32
    %25 = vector.broadcast %cst_22 : f32 to vector<14x112xf32>
    %26 = arith.maximumf %24, %25 : vector<14x112xf32>
    %c0_23 = arith.constant 0 : index
    %c0_24 = arith.constant 0 : index
    %c0_25 = arith.constant 0 : index
    %27 = vector.load %arg6[%c0_23, %c0_24, %c0_25] : memref<1x14x112xf32, #tpu.memory_space<vmem>>, vector<1x14x112xf32>
    %28 = vector.shape_cast %27 : vector<1x14x112xf32> to vector<14x112xf32>
    %29 = vector.shape_cast %26 : vector<14x112xf32> to vector<1x14x112xf32>
    tpu.vector_store %arg6[%c0_23, %c0_24, %c0_25], %29 {strides = array<i32>} : memref<1x14x112xf32, #tpu.memory_space<vmem>>, vector<1x14x112xf32>,
    return
  }
  func.func @transform_0(%arg0: i32, %arg1: i32) -> (i32, i32, i32) {
    %c0_i32 = arith.constant 0 : i32
    %c0_i32_0 = arith.constant 0 : i32
    %c0_i32_1 = arith.constant 0 : i32
    return %arg0, %c0_i32, %c0_i32_0 : i32, i32, i32
  }
  func.func @transform_1(%arg0: i32, %arg1: i32) -> (i32, i32, i32) {
    %c0_i32 = arith.constant 0 : i32
    %c0_i32_0 = arith.constant 0 : i32
    %c0_i32_1 = arith.constant 0 : i32
    %c0_i32_2 = arith.constant 0 : i32
    return %c0_i32, %c0_i32_0, %c0_i32_1 : i32, i32, i32
  }
  func.func @transform_2(%arg0: i32, %arg1: i32) -> (i32, i32) {
    %c0_i32 = arith.constant 0 : i32
    %c0_i32_0 = arith.constant 0 : i32
    %c0_i32_1 = arith.constant 0 : i32
    return %c0_i32, %c0_i32_0 : i32, i32
  }
  func.func @transform_3(%arg0: i32, %arg1: i32) -> (i32, i32) {
    %c0_i32 = arith.constant 0 : i32
    %c0_i32_0 = arith.constant 0 : i32
    %c0_i32_1 = arith.constant 0 : i32
    return %c0_i32, %c0_i32_0 : i32, i32
  }
  func.func @transform_4(%arg0: i32, %arg1: i32) -> (i32, i32, i32) {
    %c0_i32 = arith.constant 0 : i32
    %c0_i32_0 = arith.constant 0 : i32
    return %arg0, %arg1, %c0_i32 : i32, i32, i32
  }
}

</mosaic_0001>

<llo_original>
// kernel: tile.13
$region0: #{tile.13}
  #allocation0 [shape = 's32[1]{0}', space=sflag, size = 0x4, scoped, tag = 'scoped memory for tile.13']
  %s0 = inlined_call_operand.vmem [shape: f32[8], index: 0, kind: input, shape index: {}]
  %s1 = inlined_call_operand.vmem [shape: f32[14,8], index: 1, kind: output, shape index: {}]
  // Predicated region
  $region2: #{tile.13} parent=0 // pred_check
    _
  $region3: #{tile.13} parent=0 // pred_check_branch
    %3 = sbr.rel (0) target = $region5
  $region4: #{tile.13} parent=0 // pred_region
    _
  $region5: #{tile.13} parent=0 // pred_fallthru
    _
  %v4 = vld [vmem:[%s0] ss:$0 sm:$0xff]
  %5 = vst [vmem:[%s1] sm:$0xff] %v4
  %s6 = scalar_lea.vmem %s1, 8
  %7 = vst [vmem:[%s6] sm:$0xff] %v4

// kernel: tile.14
$region0: #{tile.14}
  %s0 = inlined_call_operand.vmem [shape: f32[14,8], index: 0, kind: input, shape index: {}]
  %s1 = inlined_call_operand.vmem [shape: f32[1,112], index: 1, kind: output, shape index: {}]
  $region1: #{tile.14} parent=0
    #allocation0 [shape = 'u8[4096]{0}', space=vmem, size = 0x1000, scoped, tag = 'scoped mem for output reshape']
    %v2 = vld [vmem:[%s0] sm:$0x1]
    %vm3 = vcmask 64512
    %4 = vst.msk [vmem:[#allocation0] sm:$0x1] %vm3, %v2
    %s5 = scalar_lea.vmem %s0, 13
    %v6 = vld [vmem:[%s5] sm:$0x1]
    %7 = vrot.lane.b32.xlu0 %v6, 104
    %v8 = vpop.permute.xlu0 %7
    %vm9 = vcmask 917312
    %10 = vst.msk [vmem:[#allocation0] sm:$0x1] %vm9, %v8
    %s11 = scalar_lea.vmem %s0, 12
    %v12 = vld [vmem:[%s11] sm:$0x1]
    %13 = vrot.lane.b32.xlu0 %v12, 96
    %v14 = vpop.permute.xlu0 %13
    %vm15 = vcmask 851712
    %16 = vst.msk [vmem:[#allocation0] sm:$0x1] %vm15, %v14
    %s17 = scalar_lea.vmem %s0, 11
    %v18 = vld [vmem:[%s17] sm:$0x1]
    %19 = vrot.lane.b32.xlu0 %v18, 88
    %v20 = vpop.permute.xlu0 %19
    %vm21 = vcmask 786112
    %22 = vst.msk [vmem:[#allocation0] sm:$0x1] %vm21, %v20
    %s23 = scalar_lea.vmem %s0, 10
    %v24 = vld [vmem:[%s23] sm:$0x1]
    %25 = vrot.lane.b32.xlu0 %v24, 80
    %v26 = vpop.permute.xlu0 %25
    %vm27 = vcmask 720512
    %28 = vst.msk [vmem:[#allocation0] sm:$0x1] %vm27, %v26
    %s29 = scalar_lea.vmem %s0, 9
    %v30 = vld [vmem:[%s29] sm:$0x1]
    %31 = vrot.lane.b32.xlu0 %v30, 72
    %v32 = vpop.permute.xlu0 %31
    %vm33 = vcmask 654912
    %34 = vst.msk [vmem:[#allocation0] sm:$0x1] %vm33, %v32
    %s35 = scalar_lea.vmem %s0, 8
    %v36 = vld [vmem:[%s35] sm:$0x1]
    %37 = vrot.lane.b32.xlu0 %v36, 64
    %v38 = vpop.permute.xlu0 %37
    %vm39 = vcmask 589312
    %40 = vst.msk [vmem:[#allocation0] sm:$0x1] %vm39, %v38
    %s41 = scalar_lea.vmem %s0, 7
    %v42 = vld [vmem:[%s41] sm:$0x1]
    %43 = vrot.lane.b32.xlu0 %v42, 56
    %v44 = vpop.permute.xlu0 %43
    %vm45 = vcmask 523712
    %46 = vst.msk [vmem:[#allocation0] sm:$0x1] %vm45, %v44
    %s47 = scalar_lea.vmem %s0, 6
    %v48 = vld [vmem:[%s47] sm:$0x1]
    %49 = vrot.lane.b32.xlu0 %v48, 48
    %v50 = vpop.permute.xlu0 %49
    %vm51 = vcmask 458112
    %52 = vst.msk [vmem:[#allocation0] sm:$0x1] %vm51, %v50
    %s53 = scalar_lea.vmem %s0, 5
    %v54 = vld [vmem:[%s53] sm:$0x1]
    %55 = vrot.lane.b32.xlu0 %v54, 40
    %v56 = vpop.permute.xlu0 %55
    %vm57 = vcmask 392512
    %58 = vst.msk [vmem:[#allocation0] sm:$0x1] %vm57, %v56
    %s59 = scalar_lea.vmem %s0, 4
    %v60 = vld [vmem:[%s59] sm:$0x1]
    %61 = vrot.lane.b32.xlu0 %v60, 32
    %v62 = vpop.permute.xlu0 %61
    %vm63 = vcmask 326912
    %64 = vst.msk [vmem:[#allocation0] sm:$0x1] %vm63, %v62
    %s65 = scalar_lea.vmem %s0, 3
    %v66 = vld [vmem:[%s65] sm:$0x1]
    %67 = vrot.lane.b32.xlu0 %v66, 24
    %v68 = vpop.permute.xlu0 %67
    %vm69 = vcmask 261312
    %70 = vst.msk [vmem:[#allocation0] sm:$0x1] %vm69, %v68
    %s71 = scalar_lea.vmem %s0, 2
    %v72 = vld [vmem:[%s71] sm:$0x1]
    %73 = vrot.lane.b32.xlu0 %v72, 16
    %v74 = vpop.permute.xlu0 %73
    %vm75 = vcmask 195712
    %76 = vst.msk [vmem:[#allocation0] sm:$0x1] %vm75, %v74
    %s77 = scalar_lea.vmem %s0, 1
    %v78 = vld [vmem:[%s77] sm:$0x1]
    %79 = vrot.lane.b32.xlu0 %v78, 8
    %v80 = vpop.permute.xlu0 %79
    %vm81 = vcmask 130112
    %82 = vst.msk [vmem:[#allocation0] sm:$0x1] %vm81, %v80
    %s84 = sshllo.u32 0, 1
    %v86 = vld [vmem:[#allocation0] sm:%s84]
    %s87 = sshllo.u32 0, 1
    %88 = vst [vmem:[%s1] sm:%s87] %v86

// kernel: conv_module_forward.3
$region0: #{conv_module_forward.3}
  #allocation0 [shape = 'u32[]', space=smem, size = 0x4, offset = 0x4, fixed_abs, tag = 'smem constant byte address 0x4 - core index']
  #allocation1 [shape = 'u32[144,128]{1,0:T(1,128)}', space=vmem, size = 0x12000, scoped, tag = 'internal scratch']
  %s0 = inlined_call_operand.vmem [shape: bf16[2,16,64], index: 0, kind: input, shape index: {}]
  %s1 = inlined_call_operand.vmem [shape: bf16[3,64,112], index: 1, kind: input, shape index: {}]
  %s2 = inlined_call_operand.vmem [shape: f32[1,112], index: 2, kind: input, shape index: {}]
  %s3 = inlined_call_operand.vmem [shape: f32[1,112], index: 3, kind: input, shape index: {}]
  %s4 = inlined_call_operand.vmem [shape: f32[2,14,112], index: 4, kind: output, shape index: {}]
  %s5 = sld [smem:[#allocation0]]
  $region49: #{conv_module_forward.3} parent=0
    _
  %s7 = ssub.s32 1, %s5
  %s8 = scalar_select 0, %s7, %s5
  loop: start=0, step=1, limit=4
  $region2: #{conv_module_forward.3} parent=0 // loop_pre_header
    _
  $region3: #{conv_module_forward.3} parent=0 // loop_header
    %s10 = sphi 0, %s14
    %p11 = scmp.ge.s32.totalorder %s10, 4
    %s17 = sphi 0, %s29
    %s18 = sphi 0, %s25
    %s19 = sphi 0, %s17
    %s20 = sphi 0, %s18
    %s21 = sphi 0, %s19
    %s22 = sphi 0, %s20
    %s32 = sphi 0, %s34
    %s35 = sphi 0, %s32
    %s36 = sphi 0, %s35
    %s52 = sphi 0, %s36
    %s56 = sphi 0, %s56
    %s58 = sphi 0, %s56
    %s59 = sphi 0, %s58
    %s73 = sphi 0, %s59
    %s77 = sphi 0, %s77
    %s79 = sphi 0, %s77
    %s80 = sphi 0, %s79
    %s94 = sphi 0, %s80
    %s98 = sphi 0, %s98
    %s100 = sphi 0, %s98
    %s101 = sphi 0, %s100
    %s115 = sphi 0, %s101
    %s123 = sphi 0, %s125
    %s126 = sphi 0, %s123
    %s127 = sphi 0, %s126
    %s143 = sphi 0, %s127
  $region4: #{conv_module_forward.3} parent=0 // loop_header_branch
    %13 = sbr.rel (%p11) target = $region8
  $region5: #{conv_module_forward.3} parent=0 // loop_body
    %s15 = ssub.s32 %s10, 1
    %s16 = ssub.s32 %s10, 2
    %s23 = sadd.s32 1, %s18
    %p24 = scmp.ge.s32.totalorder %s23, 1
    %s25 = scalar_select %p24, 0, %s23
    %s26 = sadd.s32 1, %s17
    %s27 = scalar_select %p24, %s26, %s17
    %p28 = scmp.ge.s32.totalorder %s27, 2
    %s29 = scalar_select %p28, 0, %s27
    %s30 = ssub.s32 %s17, %s29
    %p31 = scmp.eq.s32.totalorder %s30, 0
    %s33 = sadd.s32 %s32, 1
    %s34 = scalar_select %p31, %s32, %s33
    %p37 = pneg %p31
    %p38 = scmp.eq.s32.totalorder %s10, 1
    %p39 = por %p37, %p38
    %p40 = scmp.ne.s32.totalorder %s32, %s35
    %p41 = scmp.eq.s32.totalorder %s10, 0
    %p42 = por %p40, %p41
    %p43 = scmp.ne.s32.totalorder %s32, %s35
    %p44 = scmp.eq.s32.totalorder %s15, 1
    %p45 = por %p43, %p44
    %p46 = scmp.ne.s32.totalorder %s35, %s36
    %p47 = scmp.eq.s32.totalorder %s15, 0
    %p48 = por %p46, %p47
    %p49 = scmp.ne.s32.totalorder %s35, %s36
    %p50 = scmp.eq.s32.totalorder %s16, 1
    %p51 = por %p49, %p50
    %p53 = scmp.ne.s32.totalorder %s36, %s52
    %p54 = scmp.eq.s32.totalorder %s16, 0
    %p55 = por %p53, %p54
    %s57 = sadd.s32 %s56, 1
    %p60 = scmp.eq.s32.totalorder %s10, 1
    %p61 = scmp.ne.s32.totalorder %s56, %s58
    %p62 = scmp.eq.s32.totalorder %s10, 0
    %p63 = por %p61, %p62
    %p64 = scmp.ne.s32.totalorder %s56, %s58
    %p65 = scmp.eq.s32.totalorder %s15, 1
    %p66 = por %p64, %p65
    %p67 = scmp.ne.s32.totalorder %s58, %s59
    %p68 = scmp.eq.s32.totalorder %s15, 0
    %p69 = por %p67, %p68
    %p70 = scmp.ne.s32.totalorder %s58, %s59
    %p71 = scmp.eq.s32.totalorder %s16, 1
    %p72 = por %p70, %p71
    %p74 = scmp.ne.s32.totalorder %s59, %s73
    %p75 = scmp.eq.s32.totalorder %s16, 0
    %p76 = por %p74, %p75
    %s78 = sadd.s32 %s77, 1
    %p81 = scmp.eq.s32.totalorder %s10, 1
    %p82 = scmp.ne.s32.totalorder %s77, %s79
    %p83 = scmp.eq.s32.totalorder %s10, 0
    %p84 = por %p82, %p83
    %p85 = scmp.ne.s32.totalorder %s77, %s79
    %p86 = scmp.eq.s32.totalorder %s15, 1
    %p87 = por %p85, %p86
    %p88 = scmp.ne.s32.totalorder %s79, %s80
    %p89 = scmp.eq.s32.totalorder %s15, 0
    %p90 = por %p88, %p89
    %p91 = scmp.ne.s32.totalorder %s79, %s80
    %p92 = scmp.eq.s32.totalorder %s16, 1
    %p93 = por %p91, %p92
    %p95 = scmp.ne.s32.totalorder %s80, %s94
    %p96 = scmp.eq.s32.totalorder %s16, 0
    %p97 = por %p95, %p96
    %s99 = sadd.s32 %s98, 1
    %p102 = scmp.eq.s32.totalorder %s10, 1
    %p103 = scmp.ne.s32.totalorder %s98, %s100
    %p104 = scmp.eq.s32.totalorder %s10, 0
    %p105 = por %p103, %p104
    %p106 = scmp.ne.s32.totalorder %s98, %s100
    %p107 = scmp.eq.s32.totalorder %s15, 1
    %p108 = por %p106, %p107
    %p109 = scmp.ne.s32.totalorder %s100, %s101
    %p110 = scmp.eq.s32.totalorder %s15, 0
    %p111 = por %p109, %p110
    %p112 = scmp.ne.s32.totalorder %s100, %s101
    %p113 = scmp.eq.s32.totalorder %s16, 1
    %p114 = por %p112, %p113
    %p116 = scmp.ne.s32.totalorder %s101, %s115
    %p117 = scmp.eq.s32.totalorder %s16, 0
    %p118 = por %p116, %p117
    %s119 = ssub.s32 %s17, %s29
    %s120 = ssub.s32 %s18, %s25
    %s121 = sor.u32 %s119, %s120
    %p122 = scmp.eq.s32.totalorder %s121, 0
    %s124 = sadd.s32 %s123, 1
    %s125 = scalar_select %p122, %s123, %s124
    %p128 = pneg %p122
    %p129 = scmp.eq.s32.totalorder %s10, 1
    %p130 = por %p128, %p129
    %p131 = scmp.ne.s32.totalorder %s123, %s126
    %p132 = scmp.eq.s32.totalorder %s10, 0
    %p133 = por %p131, %p132
    %p134 = scmp.ne.s32.totalorder %s123, %s126
    %p135 = scmp.eq.s32.totalorder %s15, 1
    %p136 = por %p134, %p135
    %p137 = scmp.ne.s32.totalorder %s126, %s127
    %p138 = scmp.eq.s32.totalorder %s15, 0
    %p139 = por %p137, %p138
    %p140 = scmp.ne.s32.totalorder %s126, %s127
    %p141 = scmp.eq.s32.totalorder %s16, 1
    %p142 = por %p140, %p141
    %p144 = scmp.ne.s32.totalorder %s127, %s143
    %p145 = scmp.eq.s32.totalorder %s16, 0
    %p146 = por %p144, %p145
    %p147 = scmp.le.s32.totalorder 1, %s10
    %p148 = scmp.lt.s32.totalorder %s10, 3
    %p149 = pnand %p147, %p148
    %p150 = pneg %p149
    // Predicated region
    $region9: #{conv_module_forward.3} parent=5 // pred_check
      _
    $region10: #{conv_module_forward.3} parent=5 // pred_check_branch
      %152 = sbr.rel (%p149) target = $region12
    $region11: #{conv_module_forward.3} parent=5 // pred_region
      %s153 = ssub.s32 %s10, 1
      // Predicated region
      $region13: #{conv_module_forward.3} parent=11 // pred_check
        %p154 = pneg %p69
      $region14: #{conv_module_forward.3} parent=11 // pred_check_branch
        %156 = sbr.rel (%p154) target = $region16
      $region15: #{conv_module_forward.3} parent=11 // pred_region
        _
      $region16: #{conv_module_forward.3} parent=11 // pred_fallthru
        _
      // Predicated region
      $region17: #{conv_module_forward.3} parent=11 // pred_check
        %p157 = pneg %p90
      $region18: #{conv_module_forward.3} parent=11 // pred_check_branch
        %159 = sbr.rel (%p157) target = $region20
      $region19: #{conv_module_forward.3} parent=11 // pred_region
        _
      $region20: #{conv_module_forward.3} parent=11 // pred_fallthru
        _
      // Predicated region
      $region21: #{conv_module_forward.3} parent=11 // pred_check
        %p160 = pneg %p111
      $region22: #{conv_module_forward.3} parent=11 // pred_check_branch
        %162 = sbr.rel (%p160) target = $region24
      $region23: #{conv_module_forward.3} parent=11 // pred_region
        _
      $region24: #{conv_module_forward.3} parent=11 // pred_fallthru
        _
    $region12: #{conv_module_forward.3} parent=5 // pred_fallthru
      _
    %p163 = scmp.lt.s32.totalorder %s10, 2
    // Predicated region
    $region25: #{conv_module_forward.3} parent=5 // pred_check
      %p164 = pneg %p163
    $region26: #{conv_module_forward.3} parent=5 // pred_check_branch
      %166 = sbr.rel (%p164) target = $region28
    $region27: #{conv_module_forward.3} parent=5 // pred_region
      // Predicated region
      $region29: #{conv_module_forward.3} parent=27 // pred_check
        %p167 = pneg %p42
      $region30: #{conv_module_forward.3} parent=27 // pred_check_branch
        %169 = sbr.rel (%p167) target = $region32
      $region31: #{conv_module_forward.3} parent=27 // pred_region
        %p170 = scmp.lt.s32.totalorder %s17, 1
        %s171 = scalar_select %p170, %s17, 1
        %s172 = smul.addr %s171, 2
        %s173 = smul.addr %s172, 4
        %s174 = scalar_lea.vmem %s0, %s173
      $region32: #{conv_module_forward.3} parent=27 // pred_fallthru
        _
    $region28: #{conv_module_forward.3} parent=5 // pred_fallthru
      _
    %p175 = scmp.le.s32.totalorder 1, %s10
    %p176 = scmp.lt.s32.totalorder %s10, 3
    %p177 = pnand %p175, %p176
    %p178 = pneg %p177
    // Predicated region
    $region33: #{conv_module_forward.3} parent=5 // pred_check
      _
    $region34: #{conv_module_forward.3} parent=5 // pred_check_branch
      %180 = sbr.rel (%p177) target = $region36
    $region35: #{conv_module_forward.3} parent=5 // pred_region
      %s181 = ssub.s32 %s10, 1
      %p182 = scmp.lt.s32.totalorder %s19, 1
      %s183 = scalar_select %p182, %s19, 1
      %s184 = smul.addr %s183, 2
      %s185 = smul.addr %s184, 4
      %s186 = scalar_lea.vmem %s0, %s185
      %p187 = pneg %p48
      %p188 = pneg %p45
      %p189 = pneg %p69
      %p190 = pneg %p66
      %p191 = pneg %p90
      %p192 = pneg %p87
      %p193 = pneg %p111
      %p194 = pneg %p108
      %p195 = pneg %p139
      %p196 = pneg %p136
      %s197 = smul.u32 2, %s20
      %p198 = scmp.lt.s32.totalorder %s19, 1
      %s199 = scalar_select %p198, %s19, 1
      %p200 = scmp.lt.s32.totalorder %s197, 1
      %s201 = scalar_select %p200, %s197, 1
      %s202 = smul.addr %s199, 2
      %s203 = sadd.s32 %s201, %s202
      %s204 = smul.addr %s203, 8
      %s205 = scalar_lea.vmem %s4, %s204
      %p206 = scmp.lt.s32.totalorder %s19, 1
      %s207 = scalar_select %p206, %s19, 1
      %s208 = smul.addr %s207, 2
      %s209 = smul.addr %s208, 4
      %s210 = scalar_lea.vmem %s0, %s209
      %s211 = smul.u32 2, %s20
      %p212 = scmp.lt.s32.totalorder %s19, 1
      %s213 = scalar_select %p212, %s19, 1
      %p214 = scmp.lt.s32.totalorder %s211, 1
      %s215 = scalar_select %p214, %s211, 1
      %s216 = smul.addr %s213, 2
      %s217 = sadd.s32 %s215, %s216
      %s218 = smul.addr %s217, 8
      %s219 = scalar_lea.vmem %s4, %s218
      %s220 = smul.u32 2, %s20
      %v222 = vld [vmem:[%s210] sm:$0xf]
      %v223 = vld [vmem:[%s210 + $0x4] sm:$0x7]
      %v224 = vld [vmem:[%s1] sm:$0xf]
      %v225 = vld [vmem:[%s1 + $0x4] sm:$0xf]
      %v226 = vld [vmem:[%s1 + $0x8] sm:$0xf]
      %v227 = vld [vmem:[%s1 + $0xc] sm:$0xf]
      %v228 = vld [vmem:[%s1 + $0x10] sm:$0xf]
      %v229 = vld [vmem:[%s1 + $0x14] sm:$0xf]
      %v230 = vld [vmem:[%s1 + $0x18] sm:$0xf]
      %v231 = vld [vmem:[%s1 + $0x1c] sm:$0xf]
      %v232 = vld [vmem:[%s210 + $0x4] sm:$0xf]
      %s233 = scalar_lea.vmem %s1, 32
      %v234 = vld [vmem:[%s233] sm:$0xf]
      %v235 = vld [vmem:[%s233 + $0x4] sm:$0xf]
      %v236 = vld [vmem:[%s233 + $0x8] sm:$0xf]
      %v237 = vld [vmem:[%s233 + $0xc] sm:$0xf]
      %v238 = vld [vmem:[%s233 + $0x10] sm:$0xf]
      %v239 = vld [vmem:[%s233 + $0x14] sm:$0xf]
      %v240 = vld [vmem:[%s233 + $0x18] sm:$0xf]
      %v241 = vld [vmem:[%s233 + $0x1c] sm:$0xf]
      %v244 = vunpack.c.l.b16 %v222
      %v245 = vunpack.c.l.b16 %v232
      %v246 = vpack.c.b16 %v245, %v244
      %v248 = vshrl.u32 %v246, 16
      %v250 = vshll.u32 %v246, 16
      %v252 = vrot.slane %v250, 1
      %v253 = vor.u32 %v248, %v252
      %v262 = vunpack.c.l.b16 %v234
      %v263 = vunpack.c.l.b16 %v235
      %v264 = vunpack.c.l.b16 %v236
      %v265 = vunpack.c.l.b16 %v237
      %v266 = vunpack.c.l.b16 %v238
      %v267 = vunpack.c.l.b16 %v239
      %v268 = vunpack.c.l.b16 %v240
      %v269 = vunpack.c.l.b16 %v241
      %v270 = vpack.c.b16 %v263, %v262
      %v271 = vpack.c.b16 %v265, %v264
      %v272 = vpack.c.b16 %v267, %v266
      %v273 = vpack.c.b16 %v269, %v268
      %vm278 = vcmask 523264
      %v280 = vsel %vm278, %v253, 0
      %282 = vmatprep.subr.bf16.mxu0 0
      %283 = vmatpush1.bf16.msra.mxu0 %v270
      %284 = vmatprep.subr.bf16.mxu0 0
      %285 = vmatpush1.bf16.msra.mxu0 %v271
      %286 = vmatprep.subr.bf16.mxu0 0
      %287 = vmatpush1.bf16.msra.mxu0 %v272
      %288 = vmatprep.subr.bf16.mxu0 0
      %289 = vmatpush1.bf16.msra.mxu0 %v273
      %290 = vmatprep.subr.bf16.mxu0 0
      %291 = vmatpush1.bf16.msra.mxu0 0
      %292 = vmatprep.subr.bf16.mxu0 0
      %293 = vmatpush1.bf16.msra.mxu0 0
      %294 = vmatprep.subr.bf16.mxu0 0
      %295 = vmatpush1.bf16.msra.mxu0 0
      %296 = vmatprep.subr.bf16.mxu0 0
      %297 = vmatpush1.bf16.msra.mxu0 0
      %298 = vmatprep.subr.bf16.mxu0 0
      %299 = vmatpush1.bf16.msra.mxu0 0
      %300 = vmatprep.subr.bf16.mxu0 0
      %301 = vmatpush1.bf16.msra.mxu0 0
      %302 = vmatprep.subr.bf16.mxu0 0
      %303 = vmatpush1.bf16.msra.mxu0 0
      %304 = vmatprep.subr.bf16.mxu0 0
      %305 = vmatpush1.bf16.msra.mxu0 0
      %306 = vmatprep.subr.bf16.mxu0 0
      %307 = vmatpush1.bf16.msra.mxu0 0
      %308 = vmatprep.subr.bf16.mxu0 0
      %309 = vmatpush1.bf16.msra.mxu0 0
      %310 = vmatprep.subr.bf16.mxu0 0
      %311 = vmatpush1.bf16.msra.mxu0 0
      %312 = vmatprep.subr.bf16.mxu0 0
      %313 = vmatpush1.bf16.msra.mxu0 0
      %314 = vmatprep.mubr.bf16.mxu0 0
      %315 = vmatmul.mubr.bf16.gmra.mrb[0].mxu0 %v280
      %v316 = vpop.f32.mrb[0].mxu0
      %v317 = vadd.f32 0.0, %v316
      %v318 = vpop.f32.mrb[0].mxu0
      %v319 = vpop.f32.mrb[0].mxu0
      %v320 = vadd.f32 0.0, %v319
      %v321 = vpop.f32.mrb[0].mxu0
      %322 = vdwg.mxu0
      %v324 = vunpack.c.l.b16 %v223
      %v325 = vpack.c.b16 %v324, %v244
      %v334 = vunpack.c.l.b16 %v224
      %v335 = vunpack.c.l.b16 %v225
      %v336 = vunpack.c.l.b16 %v226
      %v337 = vunpack.c.l.b16 %v227
      %v338 = vunpack.c.l.b16 %v228
      %v339 = vunpack.c.l.b16 %v229
      %v340 = vunpack.c.l.b16 %v230
      %v341 = vunpack.c.l.b16 %v231
      %v342 = vpack.c.b16 %v335, %v334
      %v343 = vpack.c.b16 %v337, %v336
      %v344 = vpack.c.b16 %v339, %v338
      %v345 = vpack.c.b16 %v341, %v340
      %v351 = vsel %vm278, %v325, 0
      %353 = vmatprep.subr.bf16.mxu0 0
      %354 = vmatpush1.bf16.msra.mxu0 %v342
      %355 = vmatprep.subr.bf16.mxu0 0
      %356 = vmatpush1.bf16.msra.mxu0 %v343
      %357 = vmatprep.subr.bf16.mxu0 0
      %358 = vmatpush1.bf16.msra.mxu0 %v344
      %359 = vmatprep.subr.bf16.mxu0 0
      %360 = vmatpush1.bf16.msra.mxu0 %v345
      %361 = vmatprep.subr.bf16.mxu0 0
      %362 = vmatpush1.bf16.msra.mxu0 0
      %363 = vmatprep.subr.bf16.mxu0 0
      %364 = vmatpush1.bf16.msra.mxu0 0
      %365 = vmatprep.subr.bf16.mxu0 0
      %366 = vmatpush1.bf16.msra.mxu0 0
      %367 = vmatprep.subr.bf16.mxu0 0
      %368 = vmatpush1.bf16.msra.mxu0 0
      %369 = vmatprep.subr.bf16.mxu0 0
      %370 = vmatpush1.bf16.msra.mxu0 0
      %371 = vmatprep.subr.bf16.mxu0 0
      %372 = vmatpush1.bf16.msra.mxu0 0
      %373 = vmatprep.subr.bf16.mxu0 0
      %374 = vmatpush1.bf16.msra.mxu0 0
      %375 = vmatprep.subr.bf16.mxu0 0
      %376 = vmatpush1.bf16.msra.mxu0 0
      %377 = vmatprep.subr.bf16.mxu0 0
      %378 = vmatpush1.bf16.msra.mxu0 0
      %379 = vmatprep.subr.bf16.mxu0 0
      %380 = vmatpush1.bf16.msra.mxu0 0
      %381 = vmatprep.subr.bf16.mxu0 0
      %382 = vmatpush1.bf16.msra.mxu0 0
      %383 = vmatprep.subr.bf16.mxu0 0
      %384 = vmatpush1.bf16.msra.mxu0 0
      %385 = vmatprep.mubr.bf16.mxu0 0
      %386 = vmatmul.mubr.bf16.gmra.mrb[0].mxu0 %v351
      %v387 = vpop.f32.mrb[0].mxu0
      %v388 = vadd.f32 %v317, %v387
      %v389 = vpop.f32.mrb[0].mxu0
      %v390 = vpop.f32.mrb[0].mxu0
      %v391 = vadd.f32 %v320, %v390
      %v392 = vpop.f32.mrb[0].mxu0
      %393 = vdwg.mxu0
      %v394 = vld [vmem:[%s210] sm:$0xe]
      %s395 = scalar_lea.vmem %s1, 64
      %v396 = vld [vmem:[%s395] sm:$0xf]
      %v397 = vld [vmem:[%s395 + $0x4] sm:$0xf]
      %v398 = vld [vmem:[%s395 + $0x8] sm:$0xf]
      %v399 = vld [vmem:[%s395 + $0xc] sm:$0xf]
      %v400 = vld [vmem:[%s395 + $0x10] sm:$0xf]
      %v401 = vld [vmem:[%s395 + $0x14] sm:$0xf]
      %v402 = vld [vmem:[%s395 + $0x18] sm:$0xf]
      %v403 = vld [vmem:[%s395 + $0x1c] sm:$0xf]
      %v405 = vunpack.c.l.b16 %v394
      %v406 = vpack.c.b16 %v245, %v405
      %v407 = vrot.slane %v406, 1
      %v416 = vunpack.c.l.b16 %v396
      %v417 = vunpack.c.l.b16 %v397
      %v418 = vunpack.c.l.b16 %v398
      %v419 = vunpack.c.l.b16 %v399
      %v420 = vunpack.c.l.b16 %v400
      %v421 = vunpack.c.l.b16 %v401
      %v422 = vunpack.c.l.b16 %v402
      %v423 = vunpack.c.l.b16 %v403
      %v424 = vpack.c.b16 %v417, %v416
      %v425 = vpack.c.b16 %v419, %v418
      %v426 = vpack.c.b16 %v421, %v420
      %v427 = vpack.c.b16 %v423, %v422
      %v433 = vsel %vm278, %v407, 0
      %435 = vmatprep.subr.bf16.mxu0 0
      %436 = vmatpush1.bf16.msra.mxu0 %v424
      %437 = vmatprep.subr.bf16.mxu0 0
      %438 = vmatpush1.bf16.msra.mxu0 %v425
      %439 = vmatprep.subr.bf16.mxu0 0
      %440 = vmatpush1.bf16.msra.mxu0 %v426
      %441 = vmatprep.subr.bf16.mxu0 0
      %442 = vmatpush1.bf16.msra.mxu0 %v427
      %443 = vmatprep.subr.bf16.mxu0 0
      %444 = vmatpush1.bf16.msra.mxu0 0
      %445 = vmatprep.subr.bf16.mxu0 0
      %446 = vmatpush1.bf16.msra.mxu0 0
      %447 = vmatprep.subr.bf16.mxu0 0
      %448 = vmatpush1.bf16.msra.mxu0 0
      %449 = vmatprep.subr.bf16.mxu0 0
      %450 = vmatpush1.bf16.msra.mxu0 0
      %451 = vmatprep.subr.bf16.mxu0 0
      %452 = vmatpush1.bf16.msra.mxu0 0
      %453 = vmatprep.subr.bf16.mxu0 0
      %454 = vmatpush1.bf16.msra.mxu0 0
      %455 = vmatprep.subr.bf16.mxu0 0
      %456 = vmatpush1.bf16.msra.mxu0 0
      %457 = vmatprep.subr.bf16.mxu0 0
      %458 = vmatpush1.bf16.msra.mxu0 0
      %459 = vmatprep.subr.bf16.mxu0 0
      %460 = vmatpush1.bf16.msra.mxu0 0
      %461 = vmatprep.subr.bf16.mxu0 0
      %462 = vmatpush1.bf16.msra.mxu0 0
      %463 = vmatprep.subr.bf16.mxu0 0
      %464 = vmatpush1.bf16.msra.mxu0 0
      %465 = vmatprep.subr.bf16.mxu0 0
      %466 = vmatpush1.bf16.msra.mxu0 0
      %467 = vmatprep.mubr.bf16.mxu0 0
      %468 = vmatmul.mubr.bf16.gmra.mrb[0].mxu0 %v433
      %v469 = vpop.f32.mrb[0].mxu0
      %v470 = vadd.f32 0.0, %v469
      %v471 = vpop.f32.mrb[0].mxu0
      %v472 = vpop.f32.mrb[0].mxu0
      %v473 = vadd.f32 0.0, %v472
      %v474 = vpop.f32.mrb[0].mxu0
      %475 = vdwg.mxu0
      %v476 = vadd.f32 %v388, %v470
      %v477 = vadd.f32 %v391, %v473
      %v478 = vld [vmem:[%s2] sm:$0x1]
      %v480 = vlaneseq
      %v481 = vshrl.u32 %v480, 7
      %v482 = vsub.s32 0, %v481
      %v483 = vrot.slane %v478, %v482
      %v485 = vmul.f32 %v476, %v483
      %v486 = vmul.f32 %v477, %v483
      %v487 = vld [vmem:[%s3] sm:$0x1]
      %v489 = vlaneseq
      %v490 = vshrl.u32 %v489, 7
      %v491 = vsub.s32 0, %v490
      %v492 = vrot.slane %v487, %v491
      %v494 = vadd.f32 %v485, %v492
      %v495 = vadd.f32 %v486, %v492
      %v496 = vmax.f32 %v494, 0.0
      %v497 = vmax.f32 %v495, 0.0
      %vm498 = vcmask 916480
      %499 = vst.msk [vmem:[%s219] sm:$0xff] %vm498, %v496
      %vm500 = vcmask 914432
      %501 = vst.msk [vmem:[%s219 + $0x8] sm:$0x3f] %vm500, %v497
      %s502 = smul.u32 2, %s20
      %p503 = scmp.lt.s32.totalorder %s19, 1
      %s504 = scalar_select %p503, %s19, 1
      %p505 = scmp.lt.s32.totalorder %s502, 1
      %s506 = scalar_select %p505, %s502, 1
      %s507 = smul.addr %s504, 2
      %s508 = sadd.s32 %s506, %s507
      %s509 = smul.addr %s508, 8
      %s510 = scalar_lea.vmem %s4, %s509
      // Predicated region
      $region37: #{conv_module_forward.3} parent=35 // pred_check
        %p511 = pneg %p136
      $region38: #{conv_module_forward.3} parent=35 // pred_check_branch
        %513 = sbr.rel (%p511) target = $region40
      $region39: #{conv_module_forward.3} parent=35 // pred_region
        %s514 = smul.u32 2, %s20
      $region40: #{conv_module_forward.3} parent=35 // pred_fallthru
        _
    $region36: #{conv_module_forward.3} parent=5 // pred_fallthru
      _
    %p515 = scmp.le.s32.totalorder 2, %s10
    // Predicated region
    $region41: #{conv_module_forward.3} parent=5 // pred_check
      %p516 = pneg %p515
    $region42: #{conv_module_forward.3} parent=5 // pred_check_branch
      %518 = sbr.rel (%p516) target = $region44
    $region43: #{conv_module_forward.3} parent=5 // pred_region
      %s519 = ssub.s32 %s10, 2
      // Predicated region
      $region45: #{conv_module_forward.3} parent=43 // pred_check
        %p520 = pneg %p142
      $region46: #{conv_module_forward.3} parent=43 // pred_check_branch
        %522 = sbr.rel (%p520) target = $region48
      $region47: #{conv_module_forward.3} parent=43 // pred_region
        %s523 = smul.u32 2, %s22
        %p524 = scmp.lt.s32.totalorder %s21, 1
        %s525 = scalar_select %p524, %s21, 1
        %p526 = scmp.lt.s32.totalorder %s523, 1
        %s527 = scalar_select %p526, %s523, 1
        %s528 = smul.addr %s525, 2
        %s529 = sadd.s32 %s527, %s528
        %s530 = smul.addr %s529, 8
        %s531 = scalar_lea.vmem %s4, %s530
      $region48: #{conv_module_forward.3} parent=43 // pred_fallthru
        _
    $region44: #{conv_module_forward.3} parent=5 // pred_fallthru
      _
  $region6: #{conv_module_forward.3} parent=0 // loop_footer
    %s14 = sadd.s32 1, %s10
  $region7: #{conv_module_forward.3} parent=0 // loop_footer_branch
    %9 = sbr.rel target = $region3
  $region8: #{conv_module_forward.3} parent=0 // loop_exit
    _

// kernel: conv_module_forward.2
$region0: #{conv_module_forward.2}
  #allocation0 [shape = 'u32[]', space=smem, size = 0x4, offset = 0x4, fixed_abs, tag = 'smem constant byte address 0x4 - core index']
  #allocation1 [shape = 'u32[144,128]{1,0:T(1,128)}', space=vmem, size = 0x12000, scoped, tag = 'internal scratch']
  %s0 = inlined_call_operand.vmem [shape: bf16[2,16,64], index: 0, kind: input, shape index: {}]
  %s1 = inlined_call_operand.vmem [shape: bf16[3,64,112], index: 1, kind: input, shape index: {}]
  %s2 = inlined_call_operand.vmem [shape: f32[2,2,112], index: 2, kind: output, shape index: {}]
  %s3 = sld [smem:[#allocation0]]
  $region45: #{conv_module_forward.2} parent=0
    _
  %s5 = ssub.s32 1, %s3
  %s6 = scalar_select 0, %s5, %s3
  loop: start=0, step=1, limit=4
  $region2: #{conv_module_forward.2} parent=0 // loop_pre_header
    _
  $region3: #{conv_module_forward.2} parent=0 // loop_header
    %s8 = sphi 0, %s12
    %p9 = scmp.ge.s32.totalorder %s8, 4
    %s15 = sphi 0, %s27
    %s16 = sphi 0, %s23
    %s17 = sphi 0, %s15
    %s18 = sphi 0, %s16
    %s19 = sphi 0, %s17
    %s20 = sphi 0, %s18
    %s30 = sphi 0, %s32
    %s33 = sphi 0, %s30
    %s34 = sphi 0, %s33
    %s50 = sphi 0, %s34
    %s54 = sphi 0, %s54
    %s56 = sphi 0, %s54
    %s57 = sphi 0, %s56
    %s71 = sphi 0, %s57
    %s77 = sphi 0, %s79
    %s80 = sphi 0, %s77
    %s81 = sphi 0, %s80
    %s97 = sphi 0, %s81
  $region4: #{conv_module_forward.2} parent=0 // loop_header_branch
    %11 = sbr.rel (%p9) target = $region8
  $region5: #{conv_module_forward.2} parent=0 // loop_body
    %s13 = ssub.s32 %s8, 1
    %s14 = ssub.s32 %s8, 2
    %s21 = sadd.s32 1, %s16
    %p22 = scmp.ge.s32.totalorder %s21, 1
    %s23 = scalar_select %p22, 0, %s21
    %s24 = sadd.s32 1, %s15
    %s25 = scalar_select %p22, %s24, %s15
    %p26 = scmp.ge.s32.totalorder %s25, 2
    %s27 = scalar_select %p26, 0, %s25
    %s28 = ssub.s32 %s15, %s27
    %p29 = scmp.eq.s32.totalorder %s28, 0
    %s31 = sadd.s32 %s30, 1
    %s32 = scalar_select %p29, %s30, %s31
    %p35 = pneg %p29
    %p36 = scmp.eq.s32.totalorder %s8, 1
    %p37 = por %p35, %p36
    %p38 = scmp.ne.s32.totalorder %s30, %s33
    %p39 = scmp.eq.s32.totalorder %s8, 0
    %p40 = por %p38, %p39
    %p41 = scmp.ne.s32.totalorder %s30, %s33
    %p42 = scmp.eq.s32.totalorder %s13, 1
    %p43 = por %p41, %p42
    %p44 = scmp.ne.s32.totalorder %s33, %s34
    %p45 = scmp.eq.s32.totalorder %s13, 0
    %p46 = por %p44, %p45
    %p47 = scmp.ne.s32.totalorder %s33, %s34
    %p48 = scmp.eq.s32.totalorder %s14, 1
    %p49 = por %p47, %p48
    %p51 = scmp.ne.s32.totalorder %s34, %s50
    %p52 = scmp.eq.s32.totalorder %s14, 0
    %p53 = por %p51, %p52
    %s55 = sadd.s32 %s54, 1
    %p58 = scmp.eq.s32.totalorder %s8, 1
    %p59 = scmp.ne.s32.totalorder %s54, %s56
    %p60 = scmp.eq.s32.totalorder %s8, 0
    %p61 = por %p59, %p60
    %p62 = scmp.ne.s32.totalorder %s54, %s56
    %p63 = scmp.eq.s32.totalorder %s13, 1
    %p64 = por %p62, %p63
    %p65 = scmp.ne.s32.totalorder %s56, %s57
    %p66 = scmp.eq.s32.totalorder %s13, 0
    %p67 = por %p65, %p66
    %p68 = scmp.ne.s32.totalorder %s56, %s57
    %p69 = scmp.eq.s32.totalorder %s14, 1
    %p70 = por %p68, %p69
    %p72 = scmp.ne.s32.totalorder %s57, %s71
    %p73 = scmp.eq.s32.totalorder %s14, 0
    %p74 = por %p72, %p73
    %s75 = ssub.s32 %s15, %s27
    %p76 = scmp.eq.s32.totalorder %s75, 0
    %s78 = sadd.s32 %s77, 1
    %s79 = scalar_select %p76, %s77, %s78
    %p82 = pneg %p76
    %p83 = scmp.eq.s32.totalorder %s8, 1
    %p84 = por %p82, %p83
    %p85 = scmp.ne.s32.totalorder %s77, %s80
    %p86 = scmp.eq.s32.totalorder %s8, 0
    %p87 = por %p85, %p86
    %p88 = scmp.ne.s32.totalorder %s77, %s80
    %p89 = scmp.eq.s32.totalorder %s13, 1
    %p90 = por %p88, %p89
    %p91 = scmp.ne.s32.totalorder %s80, %s81
    %p92 = scmp.eq.s32.totalorder %s13, 0
    %p93 = por %p91, %p92
    %p94 = scmp.ne.s32.totalorder %s80, %s81
    %p95 = scmp.eq.s32.totalorder %s14, 1
    %p96 = por %p94, %p95
    %p98 = scmp.ne.s32.totalorder %s81, %s97
    %p99 = scmp.eq.s32.totalorder %s14, 0
    %p100 = por %p98, %p99
    %p101 = scmp.le.s32.totalorder 1, %s8
    %p102 = scmp.lt.s32.totalorder %s8, 3
    %p103 = pnand %p101, %p102
    %p104 = pneg %p103
    // Predicated region
    $region9: #{conv_module_forward.2} parent=5 // pred_check
      _
    $region10: #{conv_module_forward.2} parent=5 // pred_check_branch
      %106 = sbr.rel (%p103) target = $region12
    $region11: #{conv_module_forward.2} parent=5 // pred_region
      %s107 = ssub.s32 %s8, 1
      // Predicated region
      $region13: #{conv_module_forward.2} parent=11 // pred_check
        %p108 = pneg %p67
      $region14: #{conv_module_forward.2} parent=11 // pred_check_branch
        %110 = sbr.rel (%p108) target = $region16
      $region15: #{conv_module_forward.2} parent=11 // pred_region
        _
      $region16: #{conv_module_forward.2} parent=11 // pred_fallthru
        _
    $region12: #{conv_module_forward.2} parent=5 // pred_fallthru
      _
    %p111 = scmp.lt.s32.totalorder %s8, 2
    // Predicated region
    $region17: #{conv_module_forward.2} parent=5 // pred_check
      %p112 = pneg %p111
    $region18: #{conv_module_forward.2} parent=5 // pred_check_branch
      %114 = sbr.rel (%p112) target = $region20
    $region19: #{conv_module_forward.2} parent=5 // pred_region
      // Predicated region
      $region21: #{conv_module_forward.2} parent=19 // pred_check
        %p115 = pneg %p40
      $region22: #{conv_module_forward.2} parent=19 // pred_check_branch
        %117 = sbr.rel (%p115) target = $region24
      $region23: #{conv_module_forward.2} parent=19 // pred_region
        %p118 = scmp.lt.s32.totalorder %s15, 1
        %s119 = scalar_select %p118, %s15, 1
        %s120 = smul.addr %s119, 2
        %s121 = smul.addr %s120, 4
        %s122 = scalar_lea.vmem %s0, %s121
      $region24: #{conv_module_forward.2} parent=19 // pred_fallthru
        _
    $region20: #{conv_module_forward.2} parent=5 // pred_fallthru
      _
    %p123 = scmp.le.s32.totalorder 1, %s8
    %p124 = scmp.lt.s32.totalorder %s8, 3
    %p125 = pnand %p123, %p124
    %p126 = pneg %p125
    // Predicated region
    $region25: #{conv_module_forward.2} parent=5 // pred_check
      _
    $region26: #{conv_module_forward.2} parent=5 // pred_check_branch
      %128 = sbr.rel (%p125) target = $region28
    $region27: #{conv_module_forward.2} parent=5 // pred_region
      %s129 = ssub.s32 %s8, 1
      %p130 = scmp.lt.s32.totalorder %s17, 1
      %s131 = scalar_select %p130, %s17, 1
      %s132 = smul.addr %s131, 2
      %s133 = smul.addr %s132, 4
      %s134 = scalar_lea.vmem %s0, %s133
      %p135 = pneg %p46
      %p136 = pneg %p43
      %p137 = pneg %p67
      %p138 = pneg %p64
      %p139 = pneg %p93
      %p140 = pneg %p90
      %p141 = scmp.lt.s32.totalorder %s17, 1
      %s142 = scalar_select %p141, %s17, 1
      %s143 = smul.addr %s142, 2
      %s144 = scalar_lea.vmem %s2, %s143
      %p145 = scmp.lt.s32.totalorder %s17, 1
      %s146 = scalar_select %p145, %s17, 1
      %s147 = smul.addr %s146, 2
      %s148 = smul.addr %s147, 4
      %s149 = scalar_lea.vmem %s0, %s148
      %p150 = scmp.lt.s32.totalorder %s17, 1
      %s151 = scalar_select %p150, %s17, 1
      %s152 = smul.addr %s151, 2
      %s153 = scalar_lea.vmem %s2, %s152
      %p155 = scmp.eq.s32.totalorder %s18, 0
      // Predicated region
      $region29: #{conv_module_forward.2} parent=27 // pred_check
        %p156 = pneg %p155
      $region30: #{conv_module_forward.2} parent=27 // pred_check_branch
        %158 = sbr.rel (%p156) target = $region32
      $region31: #{conv_module_forward.2} parent=27 // pred_region
        %vm159 = vcmask 910336
        %160 = vst.msk [vmem:[%s153] sm:$0x3] %vm159, 0.0
      $region32: #{conv_module_forward.2} parent=27 // pred_fallthru
        _
      %v161 = vld [vmem:[%s149] sm:$0xf]
      %v162 = vld [vmem:[%s149 + $0x4] sm:$0x7]
      %v163 = vld [vmem:[%s1] sm:$0xf]
      %v164 = vld [vmem:[%s1 + $0x4] sm:$0xf]
      %v165 = vld [vmem:[%s1 + $0x8] sm:$0xf]
      %v166 = vld [vmem:[%s1 + $0xc] sm:$0xf]
      %v167 = vld [vmem:[%s1 + $0x10] sm:$0xf]
      %v168 = vld [vmem:[%s1 + $0x14] sm:$0xf]
      %v169 = vld [vmem:[%s1 + $0x18] sm:$0xf]
      %v170 = vld [vmem:[%s1 + $0x1c] sm:$0xf]
      %v171 = vld [vmem:[%s149 + $0x4] sm:$0xf]
      %s172 = scalar_lea.vmem %s1, 32
      %v173 = vld [vmem:[%s172] sm:$0xf]
      %v174 = vld [vmem:[%s172 + $0x4] sm:$0xf]
      %v175 = vld [vmem:[%s172 + $0x8] sm:$0xf]
      %v176 = vld [vmem:[%s172 + $0xc] sm:$0xf]
      %v177 = vld [vmem:[%s172 + $0x10] sm:$0xf]
      %v178 = vld [vmem:[%s172 + $0x14] sm:$0xf]
      %v179 = vld [vmem:[%s172 + $0x18] sm:$0xf]
      %v180 = vld [vmem:[%s172 + $0x1c] sm:$0xf]
      %v183 = vunpack.c.l.b16 %v161
      %v184 = vunpack.c.l.b16 %v171
      %v185 = vpack.c.b16 %v184, %v183
      %v187 = vshrl.u32 %v185, 16
      %v189 = vshll.u32 %v185, 16
      %v191 = vrot.slane %v189, 1
      %v192 = vor.u32 %v187, %v191
      %v201 = vunpack.c.l.b16 %v173
      %v202 = vunpack.c.l.b16 %v174
      %v203 = vunpack.c.l.b16 %v175
      %v204 = vunpack.c.l.b16 %v176
      %v205 = vunpack.c.l.b16 %v177
      %v206 = vunpack.c.l.b16 %v178
      %v207 = vunpack.c.l.b16 %v179
      %v208 = vunpack.c.l.b16 %v180
      %v209 = vpack.c.b16 %v202, %v201
      %v210 = vpack.c.b16 %v204, %v203
      %v211 = vpack.c.b16 %v206, %v205
      %v212 = vpack.c.b16 %v208, %v207
      %vm217 = vcmask 523264
      %v219 = vsel %vm217, %v192, 0
      %221 = vmatprep.subr.bf16.mxu0 0
      %222 = vmatpush1.bf16.msra.mxu0 %v209
      %223 = vmatprep.subr.bf16.mxu0 0
      %224 = vmatpush1.bf16.msra.mxu0 %v210
      %225 = vmatprep.subr.bf16.mxu0 0
      %226 = vmatpush1.bf16.msra.mxu0 %v211
      %227 = vmatprep.subr.bf16.mxu0 0
      %228 = vmatpush1.bf16.msra.mxu0 %v212
      %229 = vmatprep.subr.bf16.mxu0 0
      %230 = vmatpush1.bf16.msra.mxu0 0
      %231 = vmatprep.subr.bf16.mxu0 0
      %232 = vmatpush1.bf16.msra.mxu0 0
      %233 = vmatprep.subr.bf16.mxu0 0
      %234 = vmatpush1.bf16.msra.mxu0 0
      %235 = vmatprep.subr.bf16.mxu0 0
      %236 = vmatpush1.bf16.msra.mxu0 0
      %237 = vmatprep.subr.bf16.mxu0 0
      %238 = vmatpush1.bf16.msra.mxu0 0
      %239 = vmatprep.subr.bf16.mxu0 0
      %240 = vmatpush1.bf16.msra.mxu0 0
      %241 = vmatprep.subr.bf16.mxu0 0
      %242 = vmatpush1.bf16.msra.mxu0 0
      %243 = vmatprep.subr.bf16.mxu0 0
      %244 = vmatpush1.bf16.msra.mxu0 0
      %245 = vmatprep.subr.bf16.mxu0 0
      %246 = vmatpush1.bf16.msra.mxu0 0
      %247 = vmatprep.subr.bf16.mxu0 0
      %248 = vmatpush1.bf16.msra.mxu0 0
      %249 = vmatprep.subr.bf16.mxu0 0
      %250 = vmatpush1.bf16.msra.mxu0 0
      %251 = vmatprep.subr.bf16.mxu0 0
      %252 = vmatpush1.bf16.msra.mxu0 0
      %253 = vmatprep.mubr.bf16.mxu0 0
      %254 = vmatmul.mubr.bf16.gmra.mrb[0].mxu0 %v219
      %v255 = vpop.f32.mrb[0].mxu0
      %v256 = vadd.f32 0.0, %v255
      %v257 = vpop.f32.mrb[0].mxu0
      %v258 = vpop.f32.mrb[0].mxu0
      %v259 = vadd.f32 0.0, %v258
      %v260 = vpop.f32.mrb[0].mxu0
      %261 = vdwg.mxu0
      %v263 = vunpack.c.l.b16 %v162
      %v264 = vpack.c.b16 %v263, %v183
      %v273 = vunpack.c.l.b16 %v163
      %v274 = vunpack.c.l.b16 %v164
      %v275 = vunpack.c.l.b16 %v165
      %v276 = vunpack.c.l.b16 %v166
      %v277 = vunpack.c.l.b16 %v167
      %v278 = vunpack.c.l.b16 %v168
      %v279 = vunpack.c.l.b16 %v169
      %v280 = vunpack.c.l.b16 %v170
      %v281 = vpack.c.b16 %v274, %v273
      %v282 = vpack.c.b16 %v276, %v275
      %v283 = vpack.c.b16 %v278, %v277
      %v284 = vpack.c.b16 %v280, %v279
      %v290 = vsel %vm217, %v264, 0
      %292 = vmatprep.subr.bf16.mxu0 0
      %293 = vmatpush1.bf16.msra.mxu0 %v281
      %294 = vmatprep.subr.bf16.mxu0 0
      %295 = vmatpush1.bf16.msra.mxu0 %v282
      %296 = vmatprep.subr.bf16.mxu0 0
      %297 = vmatpush1.bf16.msra.mxu0 %v283
      %298 = vmatprep.subr.bf16.mxu0 0
      %299 = vmatpush1.bf16.msra.mxu0 %v284
      %300 = vmatprep.subr.bf16.mxu0 0
      %301 = vmatpush1.bf16.msra.mxu0 0
      %302 = vmatprep.subr.bf16.mxu0 0
      %303 = vmatpush1.bf16.msra.mxu0 0
      %304 = vmatprep.subr.bf16.mxu0 0
      %305 = vmatpush1.bf16.msra.mxu0 0
      %306 = vmatprep.subr.bf16.mxu0 0
      %307 = vmatpush1.bf16.msra.mxu0 0
      %308 = vmatprep.subr.bf16.mxu0 0
      %309 = vmatpush1.bf16.msra.mxu0 0
      %310 = vmatprep.subr.bf16.mxu0 0
      %311 = vmatpush1.bf16.msra.mxu0 0
      %312 = vmatprep.subr.bf16.mxu0 0
      %313 = vmatpush1.bf16.msra.mxu0 0
      %314 = vmatprep.subr.bf16.mxu0 0
      %315 = vmatpush1.bf16.msra.mxu0 0
      %316 = vmatprep.subr.bf16.mxu0 0
      %317 = vmatpush1.bf16.msra.mxu0 0
      %318 = vmatprep.subr.bf16.mxu0 0
      %319 = vmatpush1.bf16.msra.mxu0 0
      %320 = vmatprep.subr.bf16.mxu0 0
      %321 = vmatpush1.bf16.msra.mxu0 0
      %322 = vmatprep.subr.bf16.mxu0 0
      %323 = vmatpush1.bf16.msra.mxu0 0
      %324 = vmatprep.mubr.bf16.mxu0 0
      %325 = vmatmul.mubr.bf16.gmra.mrb[0].mxu0 %v290
      %v326 = vpop.f32.mrb[0].mxu0
      %v327 = vadd.f32 %v256, %v326
      %v328 = vpop.f32.mrb[0].mxu0
      %v329 = vpop.f32.mrb[0].mxu0
      %v330 = vadd.f32 %v259, %v329
      %v331 = vpop.f32.mrb[0].mxu0
      %332 = vdwg.mxu0
      %v333 = vld [vmem:[%s149] sm:$0xe]
      %s334 = scalar_lea.vmem %s1, 64
      %v335 = vld [vmem:[%s334] sm:$0xf]
      %v336 = vld [vmem:[%s334 + $0x4] sm:$0xf]
      %v337 = vld [vmem:[%s334 + $0x8] sm:$0xf]
      %v338 = vld [vmem:[%s334 + $0xc] sm:$0xf]
      %v339 = vld [vmem:[%s334 + $0x10] sm:$0xf]
      %v340 = vld [vmem:[%s334 + $0x14] sm:$0xf]
      %v341 = vld [vmem:[%s334 + $0x18] sm:$0xf]
      %v342 = vld [vmem:[%s334 + $0x1c] sm:$0xf]
      %v344 = vunpack.c.l.b16 %v333
      %v345 = vpack.c.b16 %v184, %v344
      %v346 = vrot.slane %v345, 1
      %v355 = vunpack.c.l.b16 %v335
      %v356 = vunpack.c.l.b16 %v336
      %v357 = vunpack.c.l.b16 %v337
      %v358 = vunpack.c.l.b16 %v338
      %v359 = vunpack.c.l.b16 %v339
      %v360 = vunpack.c.l.b16 %v340
      %v361 = vunpack.c.l.b16 %v341
      %v362 = vunpack.c.l.b16 %v342
      %v363 = vpack.c.b16 %v356, %v355
      %v364 = vpack.c.b16 %v358, %v357
      %v365 = vpack.c.b16 %v360, %v359
      %v366 = vpack.c.b16 %v362, %v361
      %v372 = vsel %vm217, %v346, 0
      %374 = vmatprep.subr.bf16.mxu0 0
      %375 = vmatpush1.bf16.msra.mxu0 %v363
      %376 = vmatprep.subr.bf16.mxu0 0
      %377 = vmatpush1.bf16.msra.mxu0 %v364
      %378 = vmatprep.subr.bf16.mxu0 0
      %379 = vmatpush1.bf16.msra.mxu0 %v365
      %380 = vmatprep.subr.bf16.mxu0 0
      %381 = vmatpush1.bf16.msra.mxu0 %v366
      %382 = vmatprep.subr.bf16.mxu0 0
      %383 = vmatpush1.bf16.msra.mxu0 0
      %384 = vmatprep.subr.bf16.mxu0 0
      %385 = vmatpush1.bf16.msra.mxu0 0
      %386 = vmatprep.subr.bf16.mxu0 0
      %387 = vmatpush1.bf16.msra.mxu0 0
      %388 = vmatprep.subr.bf16.mxu0 0
      %389 = vmatpush1.bf16.msra.mxu0 0
      %390 = vmatprep.subr.bf16.mxu0 0
      %391 = vmatpush1.bf16.msra.mxu0 0
      %392 = vmatprep.subr.bf16.mxu0 0
      %393 = vmatpush1.bf16.msra.mxu0 0
      %394 = vmatprep.subr.bf16.mxu0 0
      %395 = vmatpush1.bf16.msra.mxu0 0
      %396 = vmatprep.subr.bf16.mxu0 0
      %397 = vmatpush1.bf16.msra.mxu0 0
      %398 = vmatprep.subr.bf16.mxu0 0
      %399 = vmatpush1.bf16.msra.mxu0 0
      %400 = vmatprep.subr.bf16.mxu0 0
      %401 = vmatpush1.bf16.msra.mxu0 0
      %402 = vmatprep.subr.bf16.mxu0 0
      %403 = vmatpush1.bf16.msra.mxu0 0
      %404 = vmatprep.subr.bf16.mxu0 0
      %405 = vmatpush1.bf16.msra.mxu0 0
      %406 = vmatprep.mubr.bf16.mxu0 0
      %407 = vmatmul.mubr.bf16.gmra.mrb[0].mxu0 %v372
      %v408 = vpop.f32.mrb[0].mxu0
      %v409 = vadd.f32 0.0, %v408
      %v410 = vpop.f32.mrb[0].mxu0
      %v411 = vpop.f32.mrb[0].mxu0
      %v412 = vadd.f32 0.0, %v411
      %v413 = vpop.f32.mrb[0].mxu0
      %414 = vdwg.mxu0
      %v415 = vadd.f32 %v327, %v409
      %v416 = vadd.f32 %v330, %v412
      %v417 = vld [vmem:[%s153] sm:$0x1]
      %vm418 = vcmask 916480
      %v419 = vsel %vm418, %v415, 0.0
      %vm420 = vcmask 914432
      %v421 = vsel %vm420, %v416, 0.0
      %v422 = vadd.f32 %v419, %v421
      %v423 = vrot.slane %v422, 4
      %v424 = vadd.f32 %v422, %v423
      %v425 = vrot.slane %v424, 2
      %v426 = vadd.f32 %v424, %v425
      %v427 = vrot.slane %v426, 1
      %v428 = vadd.f32 %v426, %v427
      %v429 = vadd.f32 %v417, %v428
      %vm430 = vcmask 909312
      %431 = vst.msk [vmem:[%s153] sm:$0x1] %vm430, %v429
      %v432 = vld [vmem:[%s153 + $0x1] sm:$0x1]
      %v433 = vmul.f32 %v415, %v415
      %v434 = vmul.f32 %v416, %v416
      %v435 = vsel %vm418, %v433, 0.0
      %v436 = vsel %vm420, %v434, 0.0
      %v437 = vadd.f32 %v435, %v436
      %v438 = vrot.slane %v437, 4
      %v439 = vadd.f32 %v437, %v438
      %v440 = vrot.slane %v439, 2
      %v441 = vadd.f32 %v439, %v440
      %v442 = vrot.slane %v441, 1
      %v443 = vadd.f32 %v441, %v442
      %v444 = vadd.f32 %v432, %v443
      %445 = vst.msk [vmem:[%s153 + $0x1] sm:$0x1] %vm430, %v444
      %p446 = scmp.lt.s32.totalorder %s17, 1
      %s447 = scalar_select %p446, %s17, 1
      %s448 = smul.addr %s447, 2
      %s449 = scalar_lea.vmem %s2, %s448
      // Predicated region
      $region33: #{conv_module_forward.2} parent=27 // pred_check
        %p450 = pneg %p90
      $region34: #{conv_module_forward.2} parent=27 // pred_check_branch
        %452 = sbr.rel (%p450) target = $region36
      $region35: #{conv_module_forward.2} parent=27 // pred_region
        _
      $region36: #{conv_module_forward.2} parent=27 // pred_fallthru
        _
    $region28: #{conv_module_forward.2} parent=5 // pred_fallthru
      _
    %p453 = scmp.le.s32.totalorder 2, %s8
    // Predicated region
    $region37: #{conv_module_forward.2} parent=5 // pred_check
      %p454 = pneg %p453
    $region38: #{conv_module_forward.2} parent=5 // pred_check_branch
      %456 = sbr.rel (%p454) target = $region40
    $region39: #{conv_module_forward.2} parent=5 // pred_region
      %s457 = ssub.s32 %s8, 2
      // Predicated region
      $region41: #{conv_module_forward.2} parent=39 // pred_check
        %p458 = pneg %p96
      $region42: #{conv_module_forward.2} parent=39 // pred_check_branch
        %460 = sbr.rel (%p458) target = $region44
      $region43: #{conv_module_forward.2} parent=39 // pred_region
        %p461 = scmp.lt.s32.totalorder %s19, 1
        %s462 = scalar_select %p461, %s19, 1
        %s463 = smul.addr %s462, 2
        %s464 = scalar_lea.vmem %s2, %s463
      $region44: #{conv_module_forward.2} parent=39 // pred_fallthru
        _
    $region40: #{conv_module_forward.2} parent=5 // pred_fallthru
      _
  $region6: #{conv_module_forward.2} parent=0 // loop_footer
    %s12 = sadd.s32 1, %s8
  $region7: #{conv_module_forward.2} parent=0 // loop_footer_branch
    %7 = sbr.rel target = $region3
  $region8: #{conv_module_forward.2} parent=0 // loop_exit
    _

</llo_original>
